<compile_context>
chip_gen: v6e
topology: v6e:2x2x1
jax: 0.10.0
libtpu: 0.0.40
codegen_flags: <defaults>
</compile_context>

<pallas_src>
import functools

import jax
import jax.numpy as jnp
from jax.experimental import pallas as pl
from jax.experimental.pallas import tpu as pltpu


def _yolo_loss_kernel(coef_ref, pred_ref, targ_ref, out_ref, acc_ref, *,
                      inv_batch):
    # coef_ref: (F, 2) f32 resident in VMEM (whole array, loaded once).
    # pred_ref/targ_ref: (F, TN) tiles (anchors on lanes), pipelined by BlockSpec.
    # out_ref: (1, 1) f32 in SMEM. acc_ref: (F, TN) f32 VMEM scratch accumulator.
    i = pl.program_id(0)

    @pl.when(i == 0)
    def _():
        acc_ref[...] = jnp.zeros_like(acc_ref)

    # Keep HBM traffic in the input dtype (bf16 stays bf16); upcast after load.
    p = pred_ref[...].astype(jnp.float32)          # (F, TN)
    t = targ_ref[...].astype(jnp.float32)          # (F, TN)

    obj = t[0:1, :]                                # (1, TN) objectness per anchor
    obj2 = obj * obj                               # use obj^2 / noobj^2 so the
    noobj = 1.0 - obj                              # fold is exactly equivalent to
    noobj2 = noobj * noobj                         # (obj*diff)^2 + (noobj*diff)^2

    coef = coef_ref[...]                           # (F, 2), hoisted constants
    a = coef[:, 0:1]                               # (F, 1) obj-branch weight
    b = coef[:, 1:2]                               # (F, 1) noobj-branch weight
    w = a * obj2 + b * noobj2                      # (F, TN)

    diff = p - t
    acc_ref[...] += w * (diff * diff)              # elementwise accumulate only

    @pl.when(i == pl.num_programs(0) - 1)
    def _():
        # Single XLU reduction + single scalar store, only on the last step.
        out_ref[0, 0] = jnp.sum(acc_ref[...]) * inv_batch


def _round_up(x, m):
    return ((x + m - 1) // m) * m


def yolo_loss(predictions, targets, *, S=13, B=5, C=20,
              lambda_coord=5.0, lambda_noobj=0.5, tn=2048):
    """predictions: (batch, S, S, B*(5+C)); targets: (batch, S, S, B, 5+C)."""
    batch_size = predictions.shape[0]
    F = 5 + C
    N = batch_size * S * S * B

    pred2d = predictions.reshape(N, F)
    targ2d = targets.reshape(N, F)

    # Lane-dense layout: anchors -> lanes. Shrink the tile for small problems,
    # keep it a multiple of 128. (F=25, tn=2048) f32 tiles are ~256 KiB each, so
    # 2 inputs x 2 pipeline buffers + accumulator stays ~1.3 MiB — well inside
    # the scoped VMEM defaults of v5e (16 MiB), v6e (32 MiB) and v7x (32 MiB).
    tn = min(tn, _round_up(N, 128))
    n_pad = _round_up(N, tn)
    pad = n_pad - N
    # Zero padding is exact: diff == 0 there, so the contribution is 0.
    pred_t = jnp.pad(pred2d, ((0, pad), (0, 0))).T     # (F, n_pad)
    targ_t = jnp.pad(targ2d, ((0, pad), (0, 0))).T     # (F, n_pad)

    # Per-feature coefficient table, computed once on the host side (hoisted
    # out of the per-tile body; JAX does not CSE iota/selects across grid steps).
    f_idx = jnp.arange(F)
    coef_a = jnp.where((f_idx >= 1) & (f_idx < 5),
                       jnp.float32(lambda_coord), jnp.float32(1.0))
    coef_b = jnp.where(f_idx == 0,
                       jnp.float32(lambda_noobj), jnp.float32(0.0))
    coef = jnp.stack([coef_a, coef_b], axis=1).astype(jnp.float32)   # (F, 2)

    num_tiles = n_pad // tn
    kernel = functools.partial(_yolo_loss_kernel, inv_batch=1.0 / float(batch_size))

    # TODO(synk): on v7x, a leading "parallel" grid axis with two partial-sum
    # outputs could split the reduction across the 2 TensorCores; omitted since
    # the kernel is HBM-bound and the win is bounded.
    out = pl.pallas_call(
        kernel,
        out_shape=jax.ShapeDtypeStruct((1, 1), jnp.float32),
        grid=(num_tiles,),
        in_specs=[
            # Tiny constant table: whole array, VMEM-resident.
            pl.BlockSpec(memory_space=pltpu.MemorySpace.VMEM),
            pl.BlockSpec((F, tn), lambda i: (0, i)),
            pl.BlockSpec((F, tn), lambda i: (0, i)),
        ],
        out_specs=pl.BlockSpec(memory_space=pltpu.MemorySpace.SMEM),
        scratch_shapes=[pltpu.VMEM((F, tn), jnp.float32)],
        compiler_params=pltpu.CompilerParams(
            dimension_semantics=("arbitrary",)),
    )(coef, pred_t, targ_t)
    return out[0, 0]


def _reference_loss(predictions, targets, *, S=13, B=5, C=20,
                    lambda_coord=5.0, lambda_noobj=0.5):
    """Pure-JAX port of the PyTorch forward for correctness checking."""
    batch_size = predictions.shape[0]
    p = predictions.reshape(batch_size, S, S, B, 5 + C).astype(jnp.float32)
    t = targets.astype(jnp.float32)
    obj = t[..., 0:1]
    noobj = 1.0 - obj
    mse = lambda a, b: jnp.sum((a - b) ** 2)
    coord = lambda_coord * mse(obj * p[..., 1:5], obj * t[..., 1:5])
    conf_obj = mse(obj * p[..., 0:1], obj * t[..., 0:1])
    conf_noobj = lambda_noobj * mse(noobj * p[..., 0:1], noobj * t[..., 0:1])
    cls = mse(obj * p[..., 5:], obj * t[..., 5:])
    return (coord + conf_obj + conf_noobj + cls) / batch_size


if __name__ == "__main__":
    S, B, C = 13, 5, 20
    batch = 2
    F = 5 + C

    key = jax.random.PRNGKey(0)
    k_pred, k_obj, k_box, k_cls = jax.random.split(key, 4)

    # Predictions as the raw network output: (batch, S, S, B*(5+C)).
    predictions = jax.random.normal(k_pred, (batch, S, S, B * F), dtype=jnp.float32)

    # Targets: (batch, S, S, B, 5+C) with {0,1} objectness, box coords, one-hot classes.
    obj = jax.random.bernoulli(k_obj, p=0.3, shape=(batch, S, S, B, 1)).astype(jnp.float32)
    boxes = jax.random.uniform(k_box, (batch, S, S, B, 4), dtype=jnp.float32)
    cls_idx = jax.random.randint(k_cls, (batch, S, S, B), 0, C)
    cls_onehot = jax.nn.one_hot(cls_idx, C, dtype=jnp.float32)
    targets = jnp.concatenate([obj, boxes, cls_onehot], axis=-1)

    loss = yolo_loss(predictions, targets, S=S, B=B, C=C)
    loss = jax.block_until_ready(loss)

    ref = _reference_loss(predictions, targets, S=S, B=B, C=C)
    ref = jax.block_until_ready(ref)

    assert jnp.allclose(loss, ref, rtol=1e-5, atol=1e-5), (loss, ref)
    print("KERNEL_OK")
</pallas_src>

<mosaic_0001>
module attributes {stable_mosaic.version = 11 : i64} {
  func.func @_yolo_loss_kernel(%arg0: i32, %arg1: memref<25x2xf32, #tpu.memory_space<vmem>>, %arg2: memref<25x1792xf32, #tpu.memory_space<vmem>>, %arg3: memref<25x1792xf32, #tpu.memory_space<vmem>>, %arg4: memref<1x1xf32, #tpu.memory_space<smem>>, %arg5: memref<25x1792xf32, #tpu.memory_space<vmem>>) attributes {dimension_semantics = [#tpu.dimension_semantics<arbitrary>], iteration_bounds = array<i64: 1>, scalar_prefetch = 0 : i64, scratch_operands = 1 : i64, tpu.core_type = #tpu.core_type<tc>, window_params = [{pipeline_mode = #tpu.pipeline_mode<synchronous>, transform_indices = @transform_0, window_bounds = array<i64: 25, 2>}, {transform_indices = @transform_1, window_bounds = array<i64: 25, 1792>}, {transform_indices = @transform_2, window_bounds = array<i64: 25, 1792>}, {transform_indices = @transform_3, window_bounds = array<i64: 1, 1>}]} {
    %c0_i32 = arith.constant 0 : i32
    %0 = arith.cmpi eq, %arg0, %c0_i32 : i32
    %1 = arith.extui %0 : i1 to i32
    %c0_i32_0 = arith.constant 0 : i32
    %2 = arith.cmpi ne, %1, %c0_i32_0 : i32
    scf.if %2 {
      %cst_12 = arith.constant 0.000000e+00 : f32
      %29 = vector.broadcast %cst_12 : f32 to vector<25x1792xf32>
      %c0_13 = arith.constant 0 : index
      %c0_14 = arith.constant 0 : index
      %30 = vector.load %arg5[%c0_13, %c0_14] : memref<25x1792xf32, #tpu.memory_space<vmem>>, vector<25x1792xf32>
      tpu.vector_store %arg5[%c0_13, %c0_14], %29 {strides = array<i32>} : memref<25x1792xf32, #tpu.memory_space<vmem>>, vector<25x1792xf32>,
    } else {
    }
    %c0 = arith.constant 0 : index
    %c0_1 = arith.constant 0 : index
    %3 = vector.load %arg2[%c0, %c0_1] : memref<25x1792xf32, #tpu.memory_space<vmem>>, vector<25x1792xf32>
    %c0_2 = arith.constant 0 : index
    %c0_3 = arith.constant 0 : index
    %4 = vector.load %arg3[%c0_2, %c0_3] : memref<25x1792xf32, #tpu.memory_space<vmem>>, vector<25x1792xf32>
    %5 = vector.extract_strided_slice %4 {offsets = [0, 0], sizes = [1, 1792], strides = [1, 1]} : vector<25x1792xf32> to vector<1x1792xf32>
    %6 = arith.mulf %5, %5 : vector<1x1792xf32>
    %cst = arith.constant 1.000000e+00 : f32
    %7 = vector.broadcast %cst : f32 to vector<1x1792xf32>
    %8 = arith.subf %7, %5 : vector<1x1792xf32>
    %9 = arith.mulf %8, %8 : vector<1x1792xf32>
    %c0_4 = arith.constant 0 : index
    %c0_5 = arith.constant 0 : index
    %10 = vector.load %arg1[%c0_4, %c0_5] : memref<25x2xf32, #tpu.memory_space<vmem>>, vector<25x2xf32>
    %11 = vector.extract_strided_slice %10 {offsets = [0, 0], sizes = [25, 1], strides = [1, 1]} : vector<25x2xf32> to vector<25x1xf32>
    %12 = vector.extract_strided_slice %10 {offsets = [0, 1], sizes = [25, 1], strides = [1, 1]} : vector<25x2xf32> to vector<25x1xf32>
    %13 = vector.broadcast %11 : vector<25x1xf32> to vector<25x1792xf32>
    %14 = vector.broadcast %6 : vector<1x1792xf32> to vector<25x1792xf32>
    %15 = arith.mulf %13, %14 : vector<25x1792xf32>
    %16 = vector.broadcast %12 : vector<25x1xf32> to vector<25x1792xf32>
    %17 = vector.broadcast %9 : vector<1x1792xf32> to vector<25x1792xf32>
    %18 = arith.mulf %16, %17 : vector<25x1792xf32>
    %19 = arith.addf %15, %18 : vector<25x1792xf32>
    %20 = arith.subf %3, %4 : vector<25x1792xf32>
    %c0_6 = arith.constant 0 : index
    %c0_7 = arith.constant 0 : index
    %21 = vector.load %arg5[%c0_6, %c0_7] : memref<25x1792xf32, #tpu.memory_space<vmem>>, vector<25x1792xf32>
    %22 = arith.mulf %20, %20 : vector<25x1792xf32>
    %23 = arith.mulf %19, %22 : vector<25x1792xf32>
    %24 = arith.addf %21, %23 : vector<25x1792xf32>
    %c0_8 = arith.constant 0 : index
    %c0_9 = arith.constant 0 : index
    %25 = vector.load %arg5[%c0_8, %c0_9] : memref<25x1792xf32, #tpu.memory_space<vmem>>, vector<25x1792xf32>
    tpu.vector_store %arg5[%c0_8, %c0_9], %24 {strides = array<i32>} : memref<25x1792xf32, #tpu.memory_space<vmem>>, vector<25x1792xf32>,
    %c0_i32_10 = arith.constant 0 : i32
    %26 = arith.cmpi eq, %arg0, %c0_i32_10 : i32
    %27 = arith.extui %26 : i1 to i32
    %c0_i32_11 = arith.constant 0 : i32
    %28 = arith.cmpi ne, %27, %c0_i32_11 : i32
    scf.if %28 {
      %c0_12 = arith.constant 0 : index
      %c0_13 = arith.constant 0 : index
      %29 = vector.load %arg5[%c0_12, %c0_13] : memref<25x1792xf32, #tpu.memory_space<vmem>>, vector<25x1792xf32>
      %30 = vector.shape_cast %29 : vector<25x1792xf32> to vector<1x25x1792xf32>
      %cst_14 = arith.constant dense<0.000000e+00> : vector<1xf32>
      %31 = vector.multi_reduction <add>, %30, %cst_14 [1, 2] : vector<1x25x1792xf32> to vector<1xf32>
      %32 = vector.shape_cast %31 : vector<1xf32> to vector<1x1x1xf32>
      %33 = vector.extract %32[0, 0, 0] : f32 from vector<1x1x1xf32>
      %cst_15 = arith.constant 5.000000e-01 : f32
      %34 = arith.mulf %33, %cst_15 : f32
      %c0_16 = arith.constant 0 : index
      %c0_17 = arith.constant 0 : index
      %35 = memref.load %arg4[%c0_16, %c0_17] : memref<1x1xf32, #tpu.memory_space<smem>>
      memref.store %34, %arg4[%c0_16, %c0_17] : memref<1x1xf32, #tpu.memory_space<smem>>
    } else {
    }
    return
  }
  func.func @transform_0(%arg0: i32) -> (i32, i32) {
    %c0_i32 = arith.constant 0 : i32
    %c0_i32_0 = arith.constant 0 : i32
    %c0_i32_1 = arith.constant 0 : i32
    return %c0_i32, %c0_i32_0 : i32, i32
  }
  func.func @transform_1(%arg0: i32) -> (i32, i32) {
    %c0_i32 = arith.constant 0 : i32
    %c0_i32_0 = arith.constant 0 : i32
    return %c0_i32, %arg0 : i32, i32
  }
  func.func @transform_2(%arg0: i32) -> (i32, i32) {
    %c0_i32 = arith.constant 0 : i32
    %c0_i32_0 = arith.constant 0 : i32
    return %c0_i32, %arg0 : i32, i32
  }
  func.func @transform_3(%arg0: i32) -> (i32, i32) {
    %c0_i32 = arith.constant 0 : i32
    %c0_i32_0 = arith.constant 0 : i32
    %c0_i32_1 = arith.constant 0 : i32
    return %c0_i32, %c0_i32_0 : i32, i32
  }
}

</mosaic_0001>

<llo_original>
// kernel: tpu_custom_call.1
$region0: #{tpu_custom_call.1}
  #allocation0 [shape = 'u32[]', space=smem, size = 0x4, offset = 0x4, fixed_abs, tag = 'smem constant byte address 0x4 - core index']
  #allocation1 [shape = 'u32[144,128]{1,0:T(1,128)}', space=vmem, size = 0x12000, scoped, tag = 'internal scratch']
  #allocation2 [shape = 'f32[25,1792]{1,0:T(8,128)}', space=vmem, size = 0x38000, scoped, tag = 'scratch operand']
  %s0 = inlined_call_operand.vmem [shape: f32[25,2], index: 0, kind: input, shape index: {}]
  %s1 = inlined_call_operand.hbm [shape: f32[25,1792], index: 1, kind: input, shape index: {}]
  %s2 = inlined_call_operand.hbm [shape: f32[25,1792], index: 2, kind: input, shape index: {}]
  %s3 = inlined_call_operand.hbm [shape: f32[1,1], index: 3, kind: output, shape index: {}]
  %s4 = sld [smem:[#allocation0]]
  $region38: #{tpu_custom_call.1} parent=0
    _
  %s6 = ssub.s32 1, %s4
  %s7 = scalar_select 0, %s6, %s4
  $region1: #{tpu_custom_call.1} parent=0
    #allocation3 [shape = 'u8[229376]{0}', space=vmem, size = 0x38000, scoped, tag = 'input window, operand 1, single buffered']
    #allocation4 [shape = 's32[1]{0}', space=sflag, size = 0x4, scoped, tag = 'scoped memory for tpu_custom_call.1']
    #allocation5 [shape = 's32[1]{0}', space=sflag, size = 0x4, scoped, tag = 'scoped memory for tpu_custom_call.1']
    #allocation6 [shape = 'u8[229376]{0}', space=vmem, size = 0x38000, scoped, tag = 'input window, operand 2, single buffered']
    #allocation7 [shape = 's32[1]{0}', space=sflag, size = 0x4, scoped, tag = 'scoped memory for tpu_custom_call.1']
    #allocation8 [shape = 'u8[512]{0}', space=smem, size = 0x200, scoped, tag = 'output window, operand 0, single buffered']
    %8 = vsyncpa [#allocation4], 0
    %9 = vsyncpa [#allocation7], 0
    %10 = vsyncpa [#allocation5], 0
    // Predicated region
    $region2: #{tpu_custom_call.1} parent=1 // pred_check
      _
    $region3: #{tpu_custom_call.1} parent=1 // pred_check_branch
      %12 = sbr.rel (0) target = $region5
    $region4: #{tpu_custom_call.1} parent=1 // pred_region
      _
    $region5: #{tpu_custom_call.1} parent=1 // pred_fallthru
      _
    // Predicated region
    $region6: #{tpu_custom_call.1} parent=1 // pred_check
      _
    $region7: #{tpu_custom_call.1} parent=1 // pred_check_branch
      %14 = sbr.rel (0) target = $region9
    $region8: #{tpu_custom_call.1} parent=1 // pred_region
      %s16 = ssub.s32 7168, 7168
      %17 = vsyncadd [#allocation4], %s16
      %s18 = sshll.u32 [#allocation3], 4
      %s19 = int_to_ptr.vmem [resolvable:$true] %s18
      %24 = dma.hbm_to_vmem [thread:$0]  %s1, 7168, %s19, [#allocation4], 1792, 1792, 112
    $region9: #{tpu_custom_call.1} parent=1 // pred_fallthru
      _
    // Predicated region
    $region10: #{tpu_custom_call.1} parent=1 // pred_check
      _
    $region11: #{tpu_custom_call.1} parent=1 // pred_check_branch
      %26 = sbr.rel (0) target = $region13
    $region12: #{tpu_custom_call.1} parent=1 // pred_region
      %s28 = ssub.s32 7168, 7168
      %29 = vsyncadd [#allocation7], %s28
      %s30 = sshll.u32 [#allocation6], 4
      %s31 = int_to_ptr.vmem [resolvable:$true] %s30
      %36 = dma.hbm_to_vmem [thread:$0]  %s2, 7168, %s31, [#allocation7], 1792, 1792, 112
    $region13: #{tpu_custom_call.1} parent=1 // pred_fallthru
      _
    // Predicated region
    $region14: #{tpu_custom_call.1} parent=1 // pred_check
      _
    $region15: #{tpu_custom_call.1} parent=1 // pred_check_branch
      %38 = sbr.rel (0) target = $region17
    $region16: #{tpu_custom_call.1} parent=1 // pred_region
      %39 = dma.done [#allocation4], 7168
    $region17: #{tpu_custom_call.1} parent=1 // pred_fallthru
      _
    // Predicated region
    $region18: #{tpu_custom_call.1} parent=1 // pred_check
      _
    $region19: #{tpu_custom_call.1} parent=1 // pred_check_branch
      %41 = sbr.rel (0) target = $region21
    $region20: #{tpu_custom_call.1} parent=1 // pred_region
      %42 = dma.done [#allocation7], 7168
    $region21: #{tpu_custom_call.1} parent=1 // pred_fallthru
      _
    %p43 = scmp.eq.s32.totalorder 0, 0
    // Predicated region
    $region22: #{tpu_custom_call.1} parent=1 // pred_check
      %p44 = pneg %p43
    $region23: #{tpu_custom_call.1} parent=1 // pred_check_branch
      %46 = sbr.rel (%p44) target = $region25
    $region24: #{tpu_custom_call.1} parent=1 // pred_region
      %47 = vst [vmem:[#allocation2] sm:$0xff] 0.0
      %48 = vst [vmem:[#allocation2 + $0x8] sm:$0xff] 0.0
      %49 = vst [vmem:[#allocation2 + $0x10] sm:$0xff] 0.0
      %50 = vst [vmem:[#allocation2 + $0x18] sm:$0xff] 0.0
      %51 = vst [vmem:[#allocation2 + $0x20] sm:$0xff] 0.0
      %52 = vst [vmem:[#allocation2 + $0x28] sm:$0xff] 0.0
      %53 = vst [vmem:[#allocation2 + $0x30] sm:$0xff] 0.0
      %54 = vst [vmem:[#allocation2 + $0x38] sm:$0xff] 0.0
      %55 = vst [vmem:[#allocation2 + $0x40] sm:$0xff] 0.0
      %56 = vst [vmem:[#allocation2 + $0x48] sm:$0xff] 0.0
      %57 = vst [vmem:[#allocation2 + $0x50] sm:$0xff] 0.0
      %58 = vst [vmem:[#allocation2 + $0x58] sm:$0xff] 0.0
      %59 = vst [vmem:[#allocation2 + $0x60] sm:$0xff] 0.0
      %60 = vst [vmem:[#allocation2 + $0x68] sm:$0xff] 0.0
      %61 = vst [vmem:[#allocation2 + $0x70] sm:$0xff] 0.0
      %62 = vst [vmem:[#allocation2 + $0x78] sm:$0xff] 0.0
      %63 = vst [vmem:[#allocation2 + $0x80] sm:$0xff] 0.0
      %64 = vst [vmem:[#allocation2 + $0x88] sm:$0xff] 0.0
      %65 = vst [vmem:[#allocation2 + $0x90] sm:$0xff] 0.0
      %66 = vst [vmem:[#allocation2 + $0x98] sm:$0xff] 0.0
      %67 = vst [vmem:[#allocation2 + $0xa0] sm:$0xff] 0.0
      %68 = vst [vmem:[#allocation2 + $0xa8] sm:$0xff] 0.0
      %69 = vst [vmem:[#allocation2 + $0xb0] sm:$0xff] 0.0
      %70 = vst [vmem:[#allocation2 + $0xb8] sm:$0xff] 0.0
      %71 = vst [vmem:[#allocation2 + $0xc0] sm:$0xff] 0.0
      %72 = vst [vmem:[#allocation2 + $0xc8] sm:$0xff] 0.0
      %73 = vst [vmem:[#allocation2 + $0xd0] sm:$0xff] 0.0
      %74 = vst [vmem:[#allocation2 + $0xd8] sm:$0xff] 0.0
      %75 = vst [vmem:[#allocation2 + $0xe0] sm:$0xff] 0.0
      %76 = vst [vmem:[#allocation2 + $0xe8] sm:$0xff] 0.0
      %77 = vst [vmem:[#allocation2 + $0xf0] sm:$0xff] 0.0
      %78 = vst [vmem:[#allocation2 + $0xf8] sm:$0xff] 0.0
      %79 = vst [vmem:[#allocation2 + $0x100] sm:$0xff] 0.0
      %80 = vst [vmem:[#allocation2 + $0x108] sm:$0xff] 0.0
      %81 = vst [vmem:[#allocation2 + $0x110] sm:$0xff] 0.0
      %82 = vst [vmem:[#allocation2 + $0x118] sm:$0xff] 0.0
      %83 = vst [vmem:[#allocation2 + $0x120] sm:$0xff] 0.0
      %84 = vst [vmem:[#allocation2 + $0x128] sm:$0xff] 0.0
      %85 = vst [vmem:[#allocation2 + $0x130] sm:$0xff] 0.0
      %86 = vst [vmem:[#allocation2 + $0x138] sm:$0xff] 0.0
      %87 = vst [vmem:[#allocation2 + $0x140] sm:$0xff] 0.0
      %88 = vst [vmem:[#allocation2 + $0x148] sm:$0xff] 0.0
      %89 = vst [vmem:[#allocation2 + $0x150] sm:$0x1] 0.0
      %90 = vst [vmem:[#allocation2 + $0x158] sm:$0x1] 0.0
      %91 = vst [vmem:[#allocation2 + $0x160] sm:$0x1] 0.0
      %92 = vst [vmem:[#allocation2 + $0x168] sm:$0x1] 0.0
      %93 = vst [vmem:[#allocation2 + $0x170] sm:$0x1] 0.0
      %94 = vst [vmem:[#allocation2 + $0x178] sm:$0x1] 0.0
      %95 = vst [vmem:[#allocation2 + $0x180] sm:$0x1] 0.0
      %96 = vst [vmem:[#allocation2 + $0x188] sm:$0x1] 0.0
      %97 = vst [vmem:[#allocation2 + $0x190] sm:$0x1] 0.0
      %98 = vst [vmem:[#allocation2 + $0x198] sm:$0x1] 0.0
      %99 = vst [vmem:[#allocation2 + $0x1a0] sm:$0x1] 0.0
      %100 = vst [vmem:[#allocation2 + $0x1a8] sm:$0x1] 0.0
      %101 = vst [vmem:[#allocation2 + $0x1b0] sm:$0x1] 0.0
      %102 = vst [vmem:[#allocation2 + $0x1b8] sm:$0x1] 0.0
    $region25: #{tpu_custom_call.1} parent=1 // pred_fallthru
      _
    %v103 = vld [vmem:[#allocation3] sm:$0xff]
    %v104 = vld [vmem:[#allocation3 + $0x8] sm:$0xff]
    %v105 = vld [vmem:[#allocation3 + $0x10] sm:$0xff]
    %v106 = vld [vmem:[#allocation3 + $0x18] sm:$0xff]
    %v107 = vld [vmem:[#allocation3 + $0x20] sm:$0xff]
    %v108 = vld [vmem:[#allocation3 + $0x28] sm:$0xff]
    %v109 = vld [vmem:[#allocation3 + $0x30] sm:$0xff]
    %v110 = vld [vmem:[#allocation3 + $0x38] sm:$0xff]
    %v111 = vld [vmem:[#allocation3 + $0x40] sm:$0xff]
    %v112 = vld [vmem:[#allocation3 + $0x48] sm:$0xff]
    %v113 = vld [vmem:[#allocation3 + $0x50] sm:$0xff]
    %v114 = vld [vmem:[#allocation3 + $0x58] sm:$0xff]
    %v115 = vld [vmem:[#allocation3 + $0x60] sm:$0xff]
    %v116 = vld [vmem:[#allocation3 + $0x68] sm:$0xff]
    %v117 = vld [vmem:[#allocation3 + $0x70] sm:$0xff]
    %v118 = vld [vmem:[#allocation3 + $0x78] sm:$0xff]
    %v119 = vld [vmem:[#allocation3 + $0x80] sm:$0xff]
    %v120 = vld [vmem:[#allocation3 + $0x88] sm:$0xff]
    %v121 = vld [vmem:[#allocation3 + $0x90] sm:$0xff]
    %v122 = vld [vmem:[#allocation3 + $0x98] sm:$0xff]
    %v123 = vld [vmem:[#allocation3 + $0xa0] sm:$0xff]
    %v124 = vld [vmem:[#allocation3 + $0xa8] sm:$0xff]
    %v125 = vld [vmem:[#allocation3 + $0xb0] sm:$0xff]
    %v126 = vld [vmem:[#allocation3 + $0xb8] sm:$0xff]
    %v127 = vld [vmem:[#allocation3 + $0xc0] sm:$0xff]
    %v128 = vld [vmem:[#allocation3 + $0xc8] sm:$0xff]
    %v129 = vld [vmem:[#allocation3 + $0xd0] sm:$0xff]
    %v130 = vld [vmem:[#allocation3 + $0xd8] sm:$0xff]
    %v131 = vld [vmem:[#allocation3 + $0xe0] sm:$0xff]
    %v132 = vld [vmem:[#allocation3 + $0xe8] sm:$0xff]
    %v133 = vld [vmem:[#allocation3 + $0xf0] sm:$0xff]
    %v134 = vld [vmem:[#allocation3 + $0xf8] sm:$0xff]
    %v135 = vld [vmem:[#allocation3 + $0x100] sm:$0xff]
    %v136 = vld [vmem:[#allocation3 + $0x108] sm:$0xff]
    %v137 = vld [vmem:[#allocation3 + $0x110] sm:$0xff]
    %v138 = vld [vmem:[#allocation3 + $0x118] sm:$0xff]
    %v139 = vld [vmem:[#allocation3 + $0x120] sm:$0xff]
    %v140 = vld [vmem:[#allocation3 + $0x128] sm:$0xff]
    %v141 = vld [vmem:[#allocation3 + $0x130] sm:$0xff]
    %v142 = vld [vmem:[#allocation3 + $0x138] sm:$0xff]
    %v143 = vld [vmem:[#allocation3 + $0x140] sm:$0xff]
    %v144 = vld [vmem:[#allocation3 + $0x148] sm:$0xff]
    %v145 = vld [vmem:[#allocation3 + $0x150] sm:$0x1]
    %v146 = vld [vmem:[#allocation3 + $0x158] sm:$0x1]
    %v147 = vld [vmem:[#allocation3 + $0x160] sm:$0x1]
    %v148 = vld [vmem:[#allocation3 + $0x168] sm:$0x1]
    %v149 = vld [vmem:[#allocation3 + $0x170] sm:$0x1]
    %v150 = vld [vmem:[#allocation3 + $0x178] sm:$0x1]
    %v151 = vld [vmem:[#allocation3 + $0x180] sm:$0x1]
    %v152 = vld [vmem:[#allocation3 + $0x188] sm:$0x1]
    %v153 = vld [vmem:[#allocation3 + $0x190] sm:$0x1]
    %v154 = vld [vmem:[#allocation3 + $0x198] sm:$0x1]
    %v155 = vld [vmem:[#allocation3 + $0x1a0] sm:$0x1]
    %v156 = vld [vmem:[#allocation3 + $0x1a8] sm:$0x1]
    %v157 = vld [vmem:[#allocation3 + $0x1b0] sm:$0x1]
    %v158 = vld [vmem:[#allocation3 + $0x1b8] sm:$0x1]
    %v159 = vld [vmem:[#allocation6] sm:$0xff]
    %v160 = vld [vmem:[#allocation6 + $0x8] sm:$0xff]
    %v161 = vld [vmem:[#allocation6 + $0x10] sm:$0xff]
    %v162 = vld [vmem:[#allocation6 + $0x18] sm:$0xff]
    %v163 = vld [vmem:[#allocation6 + $0x20] sm:$0xff]
    %v164 = vld [vmem:[#allocation6 + $0x28] sm:$0xff]
    %v165 = vld [vmem:[#allocation6 + $0x30] sm:$0xff]
    %v166 = vld [vmem:[#allocation6 + $0x38] sm:$0xff]
    %v167 = vld [vmem:[#allocation6 + $0x40] sm:$0xff]
    %v168 = vld [vmem:[#allocation6 + $0x48] sm:$0xff]
    %v169 = vld [vmem:[#allocation6 + $0x50] sm:$0xff]
    %v170 = vld [vmem:[#allocation6 + $0x58] sm:$0xff]
    %v171 = vld [vmem:[#allocation6 + $0x60] sm:$0xff]
    %v172 = vld [vmem:[#allocation6 + $0x68] sm:$0xff]
    %v173 = vld [vmem:[#allocation6 + $0x70] sm:$0xff]
    %v174 = vld [vmem:[#allocation6 + $0x78] sm:$0xff]
    %v175 = vld [vmem:[#allocation6 + $0x80] sm:$0xff]
    %v176 = vld [vmem:[#allocation6 + $0x88] sm:$0xff]
    %v177 = vld [vmem:[#allocation6 + $0x90] sm:$0xff]
    %v178 = vld [vmem:[#allocation6 + $0x98] sm:$0xff]
    %v179 = vld [vmem:[#allocation6 + $0xa0] sm:$0xff]
    %v180 = vld [vmem:[#allocation6 + $0xa8] sm:$0xff]
    %v181 = vld [vmem:[#allocation6 + $0xb0] sm:$0xff]
    %v182 = vld [vmem:[#allocation6 + $0xb8] sm:$0xff]
    %v183 = vld [vmem:[#allocation6 + $0xc0] sm:$0xff]
    %v184 = vld [vmem:[#allocation6 + $0xc8] sm:$0xff]
    %v185 = vld [vmem:[#allocation6 + $0xd0] sm:$0xff]
    %v186 = vld [vmem:[#allocation6 + $0xd8] sm:$0xff]
    %v187 = vld [vmem:[#allocation6 + $0xe0] sm:$0xff]
    %v188 = vld [vmem:[#allocation6 + $0xe8] sm:$0xff]
    %v189 = vld [vmem:[#allocation6 + $0xf0] sm:$0xff]
    %v190 = vld [vmem:[#allocation6 + $0xf8] sm:$0xff]
    %v191 = vld [vmem:[#allocation6 + $0x100] sm:$0xff]
    %v192 = vld [vmem:[#allocation6 + $0x108] sm:$0xff]
    %v193 = vld [vmem:[#allocation6 + $0x110] sm:$0xff]
    %v194 = vld [vmem:[#allocation6 + $0x118] sm:$0xff]
    %v195 = vld [vmem:[#allocation6 + $0x120] sm:$0xff]
    %v196 = vld [vmem:[#allocation6 + $0x128] sm:$0xff]
    %v197 = vld [vmem:[#allocation6 + $0x130] sm:$0xff]
    %v198 = vld [vmem:[#allocation6 + $0x138] sm:$0xff]
    %v199 = vld [vmem:[#allocation6 + $0x140] sm:$0xff]
    %v200 = vld [vmem:[#allocation6 + $0x148] sm:$0xff]
    %v201 = vld [vmem:[#allocation6 + $0x150] sm:$0x1]
    %v202 = vld [vmem:[#allocation6 + $0x158] sm:$0x1]
    %v203 = vld [vmem:[#allocation6 + $0x160] sm:$0x1]
    %v204 = vld [vmem:[#allocation6 + $0x168] sm:$0x1]
    %v205 = vld [vmem:[#allocation6 + $0x170] sm:$0x1]
    %v206 = vld [vmem:[#allocation6 + $0x178] sm:$0x1]
    %v207 = vld [vmem:[#allocation6 + $0x180] sm:$0x1]
    %v208 = vld [vmem:[#allocation6 + $0x188] sm:$0x1]
    %v209 = vld [vmem:[#allocation6 + $0x190] sm:$0x1]
    %v210 = vld [vmem:[#allocation6 + $0x198] sm:$0x1]
    %v211 = vld [vmem:[#allocation6 + $0x1a0] sm:$0x1]
    %v212 = vld [vmem:[#allocation6 + $0x1a8] sm:$0x1]
    %v213 = vld [vmem:[#allocation6 + $0x1b0] sm:$0x1]
    %v214 = vld [vmem:[#allocation6 + $0x1b8] sm:$0x1]
    %v215 = vmul.f32 %v159, %v159
    %v216 = vmul.f32 %v160, %v160
    %v217 = vmul.f32 %v161, %v161
    %v218 = vmul.f32 %v162, %v162
    %v219 = vmul.f32 %v163, %v163
    %v220 = vmul.f32 %v164, %v164
    %v221 = vmul.f32 %v165, %v165
    %v222 = vmul.f32 %v166, %v166
    %v223 = vmul.f32 %v167, %v167
    %v224 = vmul.f32 %v168, %v168
    %v225 = vmul.f32 %v169, %v169
    %v226 = vmul.f32 %v170, %v170
    %v227 = vmul.f32 %v171, %v171
    %v228 = vmul.f32 %v172, %v172
    %v229 = vsub.f32 1.0, %v159
    %v230 = vsub.f32 1.0, %v160
    %v231 = vsub.f32 1.0, %v161
    %v232 = vsub.f32 1.0, %v162
    %v233 = vsub.f32 1.0, %v163
    %v234 = vsub.f32 1.0, %v164
    %v235 = vsub.f32 1.0, %v165
    %v236 = vsub.f32 1.0, %v166
    %v237 = vsub.f32 1.0, %v167
    %v238 = vsub.f32 1.0, %v168
    %v239 = vsub.f32 1.0, %v169
    %v240 = vsub.f32 1.0, %v170
    %v241 = vsub.f32 1.0, %v171
    %v242 = vsub.f32 1.0, %v172
    %v243 = vmul.f32 %v229, %v229
    %v244 = vmul.f32 %v230, %v230
    %v245 = vmul.f32 %v231, %v231
    %v246 = vmul.f32 %v232, %v232
    %v247 = vmul.f32 %v233, %v233
    %v248 = vmul.f32 %v234, %v234
    %v249 = vmul.f32 %v235, %v235
    %v250 = vmul.f32 %v236, %v236
    %v251 = vmul.f32 %v237, %v237
    %v252 = vmul.f32 %v238, %v238
    %v253 = vmul.f32 %v239, %v239
    %v254 = vmul.f32 %v240, %v240
    %v255 = vmul.f32 %v241, %v241
    %v256 = vmul.f32 %v242, %v242
    %v257 = vld [vmem:[%s0] sm:$0xff]
    %v258 = vld [vmem:[%s0 + $0x8] sm:$0xff]
    %v259 = vld [vmem:[%s0 + $0x10] sm:$0xff]
    %v260 = vld [vmem:[%s0 + $0x18] sm:$0x1]
    %262 = vset.pattern.permute.xlu0 0
    %263 = vperm.xlu0 %262, %v257
    %v264 = vpop.permute.xlu0 %263
    %267 = vset.pattern.permute.xlu0 0
    %268 = vperm.xlu0 %267, %v258
    %v269 = vpop.permute.xlu0 %268
    %272 = vset.pattern.permute.xlu0 0
    %273 = vperm.xlu0 %272, %v259
    %v274 = vpop.permute.xlu0 %273
    %277 = vset.pattern.permute.xlu0 0
    %278 = vperm.xlu0 %277, %v260
    %v279 = vpop.permute.xlu0 %278
    %v281 = vlaneseq
    %v282 = vshrl.u32 %v281, 7
    %v283 = vsub.s32 0, %v282
    %v284 = vrot.slane %v215, %v283
    %v285 = vlaneseq
    %v286 = vshrl.u32 %v285, 7
    %v287 = vsub.s32 0, %v286
    %v288 = vrot.slane %v216, %v287
    %v289 = vlaneseq
    %v290 = vshrl.u32 %v289, 7
    %v291 = vsub.s32 0, %v290
    %v292 = vrot.slane %v217, %v291
    %v293 = vlaneseq
    %v294 = vshrl.u32 %v293, 7
    %v295 = vsub.s32 0, %v294
    %v296 = vrot.slane %v218, %v295
    %v297 = vlaneseq
    %v298 = vshrl.u32 %v297, 7
    %v299 = vsub.s32 0, %v298
    %v300 = vrot.slane %v219, %v299
    %v301 = vlaneseq
    %v302 = vshrl.u32 %v301, 7
    %v303 = vsub.s32 0, %v302
    %v304 = vrot.slane %v220, %v303
    %v305 = vlaneseq
    %v306 = vshrl.u32 %v305, 7
    %v307 = vsub.s32 0, %v306
    %v308 = vrot.slane %v221, %v307
    %v309 = vlaneseq
    %v310 = vshrl.u32 %v309, 7
    %v311 = vsub.s32 0, %v310
    %v312 = vrot.slane %v222, %v311
    %v313 = vlaneseq
    %v314 = vshrl.u32 %v313, 7
    %v315 = vsub.s32 0, %v314
    %v316 = vrot.slane %v223, %v315
    %v317 = vlaneseq
    %v318 = vshrl.u32 %v317, 7
    %v319 = vsub.s32 0, %v318
    %v320 = vrot.slane %v224, %v319
    %v321 = vlaneseq
    %v322 = vshrl.u32 %v321, 7
    %v323 = vsub.s32 0, %v322
    %v324 = vrot.slane %v225, %v323
    %v325 = vlaneseq
    %v326 = vshrl.u32 %v325, 7
    %v327 = vsub.s32 0, %v326
    %v328 = vrot.slane %v226, %v327
    %v329 = vlaneseq
    %v330 = vshrl.u32 %v329, 7
    %v331 = vsub.s32 0, %v330
    %v332 = vrot.slane %v227, %v331
    %v333 = vlaneseq
    %v334 = vshrl.u32 %v333, 7
    %v335 = vsub.s32 0, %v334
    %v336 = vrot.slane %v228, %v335
    %v337 = vmul.f32 %v264, %v284
    %v338 = vmul.f32 %v264, %v288
    %v339 = vmul.f32 %v264, %v292
    %v340 = vmul.f32 %v264, %v296
    %v341 = vmul.f32 %v264, %v300
    %v342 = vmul.f32 %v264, %v304
    %v343 = vmul.f32 %v264, %v308
    %v344 = vmul.f32 %v264, %v312
    %v345 = vmul.f32 %v264, %v316
    %v346 = vmul.f32 %v264, %v320
    %v347 = vmul.f32 %v264, %v324
    %v348 = vmul.f32 %v264, %v328
    %v349 = vmul.f32 %v264, %v332
    %v350 = vmul.f32 %v264, %v336
    %v351 = vmul.f32 %v269, %v284
    %v352 = vmul.f32 %v269, %v288
    %v353 = vmul.f32 %v269, %v292
    %v354 = vmul.f32 %v269, %v296
    %v355 = vmul.f32 %v269, %v300
    %v356 = vmul.f32 %v269, %v304
    %v357 = vmul.f32 %v269, %v308
    %v358 = vmul.f32 %v269, %v312
    %v359 = vmul.f32 %v269, %v316
    %v360 = vmul.f32 %v269, %v320
    %v361 = vmul.f32 %v269, %v324
    %v362 = vmul.f32 %v269, %v328
    %v363 = vmul.f32 %v269, %v332
    %v364 = vmul.f32 %v269, %v336
    %v365 = vmul.f32 %v274, %v284
    %v366 = vmul.f32 %v274, %v288
    %v367 = vmul.f32 %v274, %v292
    %v368 = vmul.f32 %v274, %v296
    %v369 = vmul.f32 %v274, %v300
    %v370 = vmul.f32 %v274, %v304
    %v371 = vmul.f32 %v274, %v308
    %v372 = vmul.f32 %v274, %v312
    %v373 = vmul.f32 %v274, %v316
    %v374 = vmul.f32 %v274, %v320
    %v375 = vmul.f32 %v274, %v324
    %v376 = vmul.f32 %v274, %v328
    %v377 = vmul.f32 %v274, %v332
    %v378 = vmul.f32 %v274, %v336
    %v379 = vmul.f32 %v279, %v284
    %v380 = vmul.f32 %v279, %v288
    %v381 = vmul.f32 %v279, %v292
    %v382 = vmul.f32 %v279, %v296
    %v383 = vmul.f32 %v279, %v300
    %v384 = vmul.f32 %v279, %v304
    %v385 = vmul.f32 %v279, %v308
    %v386 = vmul.f32 %v279, %v312
    %v387 = vmul.f32 %v279, %v316
    %v388 = vmul.f32 %v279, %v320
    %v389 = vmul.f32 %v279, %v324
    %v390 = vmul.f32 %v279, %v328
    %v391 = vmul.f32 %v279, %v332
    %v392 = vmul.f32 %v279, %v336
    %393 = vset.pattern.permute.xlu0 1
    %394 = vperm.xlu0 %393, %v257
    %v395 = vpop.permute.xlu0 %394
    %397 = vset.pattern.permute.xlu0 1
    %398 = vperm.xlu0 %397, %v258
    %v399 = vpop.permute.xlu0 %398
    %401 = vset.pattern.permute.xlu0 1
    %402 = vperm.xlu0 %401, %v259
    %v403 = vpop.permute.xlu0 %402
    %405 = vset.pattern.permute.xlu0 1
    %406 = vperm.xlu0 %405, %v260
    %v407 = vpop.permute.xlu0 %406
    %v409 = vlaneseq
    %v410 = vshrl.u32 %v409, 7
    %v411 = vsub.s32 0, %v410
    %v412 = vrot.slane %v243, %v411
    %v413 = vlaneseq
    %v414 = vshrl.u32 %v413, 7
    %v415 = vsub.s32 0, %v414
    %v416 = vrot.slane %v244, %v415
    %v417 = vlaneseq
    %v418 = vshrl.u32 %v417, 7
    %v419 = vsub.s32 0, %v418
    %v420 = vrot.slane %v245, %v419
    %v421 = vlaneseq
    %v422 = vshrl.u32 %v421, 7
    %v423 = vsub.s32 0, %v422
    %v424 = vrot.slane %v246, %v423
    %v425 = vlaneseq
    %v426 = vshrl.u32 %v425, 7
    %v427 = vsub.s32 0, %v426
    %v428 = vrot.slane %v247, %v427
    %v429 = vlaneseq
    %v430 = vshrl.u32 %v429, 7
    %v431 = vsub.s32 0, %v430
    %v432 = vrot.slane %v248, %v431
    %v433 = vlaneseq
    %v434 = vshrl.u32 %v433, 7
    %v435 = vsub.s32 0, %v434
    %v436 = vrot.slane %v249, %v435
    %v437 = vlaneseq
    %v438 = vshrl.u32 %v437, 7
    %v439 = vsub.s32 0, %v438
    %v440 = vrot.slane %v250, %v439
    %v441 = vlaneseq
    %v442 = vshrl.u32 %v441, 7
    %v443 = vsub.s32 0, %v442
    %v444 = vrot.slane %v251, %v443
    %v445 = vlaneseq
    %v446 = vshrl.u32 %v445, 7
    %v447 = vsub.s32 0, %v446
    %v448 = vrot.slane %v252, %v447
    %v449 = vlaneseq
    %v450 = vshrl.u32 %v449, 7
    %v451 = vsub.s32 0, %v450
    %v452 = vrot.slane %v253, %v451
    %v453 = vlaneseq
    %v454 = vshrl.u32 %v453, 7
    %v455 = vsub.s32 0, %v454
    %v456 = vrot.slane %v254, %v455
    %v457 = vlaneseq
    %v458 = vshrl.u32 %v457, 7
    %v459 = vsub.s32 0, %v458
    %v460 = vrot.slane %v255, %v459
    %v461 = vlaneseq
    %v462 = vshrl.u32 %v461, 7
    %v463 = vsub.s32 0, %v462
    %v464 = vrot.slane %v256, %v463
    %v465 = vmul.f32 %v395, %v412
    %v466 = vmul.f32 %v395, %v416
    %v467 = vmul.f32 %v395, %v420
    %v468 = vmul.f32 %v395, %v424
    %v469 = vmul.f32 %v395, %v428
    %v470 = vmul.f32 %v395, %v432
    %v471 = vmul.f32 %v395, %v436
    %v472 = vmul.f32 %v395, %v440
    %v473 = vmul.f32 %v395, %v444
    %v474 = vmul.f32 %v395, %v448
    %v475 = vmul.f32 %v395, %v452
    %v476 = vmul.f32 %v395, %v456
    %v477 = vmul.f32 %v395, %v460
    %v478 = vmul.f32 %v395, %v464
    %v479 = vmul.f32 %v399, %v412
    %v480 = vmul.f32 %v399, %v416
    %v481 = vmul.f32 %v399, %v420
    %v482 = vmul.f32 %v399, %v424
    %v483 = vmul.f32 %v399, %v428
    %v484 = vmul.f32 %v399, %v432
    %v485 = vmul.f32 %v399, %v436
    %v486 = vmul.f32 %v399, %v440
    %v487 = vmul.f32 %v399, %v444
    %v488 = vmul.f32 %v399, %v448
    %v489 = vmul.f32 %v399, %v452
    %v490 = vmul.f32 %v399, %v456
    %v491 = vmul.f32 %v399, %v460
    %v492 = vmul.f32 %v399, %v464
    %v493 = vmul.f32 %v403, %v412
    %v494 = vmul.f32 %v403, %v416
    %v495 = vmul.f32 %v403, %v420
    %v496 = vmul.f32 %v403, %v424
    %v497 = vmul.f32 %v403, %v428
    %v498 = vmul.f32 %v403, %v432
    %v499 = vmul.f32 %v403, %v436
    %v500 = vmul.f32 %v403, %v440
    %v501 = vmul.f32 %v403, %v444
    %v502 = vmul.f32 %v403, %v448
    %v503 = vmul.f32 %v403, %v452
    %v504 = vmul.f32 %v403, %v456
    %v505 = vmul.f32 %v403, %v460
    %v506 = vmul.f32 %v403, %v464
    %v507 = vmul.f32 %v407, %v412
    %v508 = vmul.f32 %v407, %v416
    %v509 = vmul.f32 %v407, %v420
    %v510 = vmul.f32 %v407, %v424
    %v511 = vmul.f32 %v407, %v428
    %v512 = vmul.f32 %v407, %v432
    %v513 = vmul.f32 %v407, %v436
    %v514 = vmul.f32 %v407, %v440
    %v515 = vmul.f32 %v407, %v444
    %v516 = vmul.f32 %v407, %v448
    %v517 = vmul.f32 %v407, %v452
    %v518 = vmul.f32 %v407, %v456
    %v519 = vmul.f32 %v407, %v460
    %v520 = vmul.f32 %v407, %v464
    %v521 = vadd.f32 %v337, %v465
    %v522 = vadd.f32 %v338, %v466
    %v523 = vadd.f32 %v339, %v467
    %v524 = vadd.f32 %v340, %v468
    %v525 = vadd.f32 %v341, %v469
    %v526 = vadd.f32 %v342, %v470
    %v527 = vadd.f32 %v343, %v471
    %v528 = vadd.f32 %v344, %v472
    %v529 = vadd.f32 %v345, %v473
    %v530 = vadd.f32 %v346, %v474
    %v531 = vadd.f32 %v347, %v475
    %v532 = vadd.f32 %v348, %v476
    %v533 = vadd.f32 %v349, %v477
    %v534 = vadd.f32 %v350, %v478
    %v535 = vadd.f32 %v351, %v479
    %v536 = vadd.f32 %v352, %v480
    %v537 = vadd.f32 %v353, %v481
    %v538 = vadd.f32 %v354, %v482
    %v539 = vadd.f32 %v355, %v483
    %v540 = vadd.f32 %v356, %v484
    %v541 = vadd.f32 %v357, %v485
    %v542 = vadd.f32 %v358, %v486
    %v543 = vadd.f32 %v359, %v487
    %v544 = vadd.f32 %v360, %v488
    %v545 = vadd.f32 %v361, %v489
    %v546 = vadd.f32 %v362, %v490
    %v547 = vadd.f32 %v363, %v491
    %v548 = vadd.f32 %v364, %v492
    %v549 = vadd.f32 %v365, %v493
    %v550 = vadd.f32 %v366, %v494
    %v551 = vadd.f32 %v367, %v495
    %v552 = vadd.f32 %v368, %v496
    %v553 = vadd.f32 %v369, %v497
    %v554 = vadd.f32 %v370, %v498
    %v555 = vadd.f32 %v371, %v499
    %v556 = vadd.f32 %v372, %v500
    %v557 = vadd.f32 %v373, %v501
    %v558 = vadd.f32 %v374, %v502
    %v559 = vadd.f32 %v375, %v503
    %v560 = vadd.f32 %v376, %v504
    %v561 = vadd.f32 %v377, %v505
    %v562 = vadd.f32 %v378, %v506
    %v563 = vadd.f32 %v379, %v507
    %v564 = vadd.f32 %v380, %v508
    %v565 = vadd.f32 %v381, %v509
    %v566 = vadd.f32 %v382, %v510
    %v567 = vadd.f32 %v383, %v511
    %v568 = vadd.f32 %v384, %v512
    %v569 = vadd.f32 %v385, %v513
    %v570 = vadd.f32 %v386, %v514
    %v571 = vadd.f32 %v387, %v515
    %v572 = vadd.f32 %v388, %v516
    %v573 = vadd.f32 %v389, %v517
    %v574 = vadd.f32 %v390, %v518
    %v575 = vadd.f32 %v391, %v519
    %v576 = vadd.f32 %v392, %v520
    %v577 = vsub.f32 %v103, %v159
    %v578 = vsub.f32 %v104, %v160
    %v579 = vsub.f32 %v105, %v161
    %v580 = vsub.f32 %v106, %v162
    %v581 = vsub.f32 %v107, %v163
    %v582 = vsub.f32 %v108, %v164
    %v583 = vsub.f32 %v109, %v165
    %v584 = vsub.f32 %v110, %v166
    %v585 = vsub.f32 %v111, %v167
    %v586 = vsub.f32 %v112, %v168
    %v587 = vsub.f32 %v113, %v169
    %v588 = vsub.f32 %v114, %v170
    %v589 = vsub.f32 %v115, %v171
    %v590 = vsub.f32 %v116, %v172
    %v591 = vsub.f32 %v117, %v173
    %v592 = vsub.f32 %v118, %v174
    %v593 = vsub.f32 %v119, %v175
    %v594 = vsub.f32 %v120, %v176
    %v595 = vsub.f32 %v121, %v177
    %v596 = vsub.f32 %v122, %v178
    %v597 = vsub.f32 %v123, %v179
    %v598 = vsub.f32 %v124, %v180
    %v599 = vsub.f32 %v125, %v181
    %v600 = vsub.f32 %v126, %v182
    %v601 = vsub.f32 %v127, %v183
    %v602 = vsub.f32 %v128, %v184
    %v603 = vsub.f32 %v129, %v185
    %v604 = vsub.f32 %v130, %v186
    %v605 = vsub.f32 %v131, %v187
    %v606 = vsub.f32 %v132, %v188
    %v607 = vsub.f32 %v133, %v189
    %v608 = vsub.f32 %v134, %v190
    %v609 = vsub.f32 %v135, %v191
    %v610 = vsub.f32 %v136, %v192
    %v611 = vsub.f32 %v137, %v193
    %v612 = vsub.f32 %v138, %v194
    %v613 = vsub.f32 %v139, %v195
    %v614 = vsub.f32 %v140, %v196
    %v615 = vsub.f32 %v141, %v197
    %v616 = vsub.f32 %v142, %v198
    %v617 = vsub.f32 %v143, %v199
    %v618 = vsub.f32 %v144, %v200
    %v619 = vsub.f32 %v145, %v201
    %v620 = vsub.f32 %v146, %v202
    %v621 = vsub.f32 %v147, %v203
    %v622 = vsub.f32 %v148, %v204
    %v623 = vsub.f32 %v149, %v205
    %v624 = vsub.f32 %v150, %v206
    %v625 = vsub.f32 %v151, %v207
    %v626 = vsub.f32 %v152, %v208
    %v627 = vsub.f32 %v153, %v209
    %v628 = vsub.f32 %v154, %v210
    %v629 = vsub.f32 %v155, %v211
    %v630 = vsub.f32 %v156, %v212
    %v631 = vsub.f32 %v157, %v213
    %v632 = vsub.f32 %v158, %v214
    %v633 = vld [vmem:[#allocation2] sm:$0xff]
    %v634 = vld [vmem:[#allocation2 + $0x8] sm:$0xff]
    %v635 = vld [vmem:[#allocation2 + $0x10] sm:$0xff]
    %v636 = vld [vmem:[#allocation2 + $0x18] sm:$0xff]
    %v637 = vld [vmem:[#allocation2 + $0x20] sm:$0xff]
    %v638 = vld [vmem:[#allocation2 + $0x28] sm:$0xff]
    %v639 = vld [vmem:[#allocation2 + $0x30] sm:$0xff]
    %v640 = vld [vmem:[#allocation2 + $0x38] sm:$0xff]
    %v641 = vld [vmem:[#allocation2 + $0x40] sm:$0xff]
    %v642 = vld [vmem:[#allocation2 + $0x48] sm:$0xff]
    %v643 = vld [vmem:[#allocation2 + $0x50] sm:$0xff]
    %v644 = vld [vmem:[#allocation2 + $0x58] sm:$0xff]
    %v645 = vld [vmem:[#allocation2 + $0x60] sm:$0xff]
    %v646 = vld [vmem:[#allocation2 + $0x68] sm:$0xff]
    %v647 = vld [vmem:[#allocation2 + $0x70] sm:$0xff]
    %v648 = vld [vmem:[#allocation2 + $0x78] sm:$0xff]
    %v649 = vld [vmem:[#allocation2 + $0x80] sm:$0xff]
    %v650 = vld [vmem:[#allocation2 + $0x88] sm:$0xff]
    %v651 = vld [vmem:[#allocation2 + $0x90] sm:$0xff]
    %v652 = vld [vmem:[#allocation2 + $0x98] sm:$0xff]
    %v653 = vld [vmem:[#allocation2 + $0xa0] sm:$0xff]
    %v654 = vld [vmem:[#allocation2 + $0xa8] sm:$0xff]
    %v655 = vld [vmem:[#allocation2 + $0xb0] sm:$0xff]
    %v656 = vld [vmem:[#allocation2 + $0xb8] sm:$0xff]
    %v657 = vld [vmem:[#allocation2 + $0xc0] sm:$0xff]
    %v658 = vld [vmem:[#allocation2 + $0xc8] sm:$0xff]
    %v659 = vld [vmem:[#allocation2 + $0xd0] sm:$0xff]
    %v660 = vld [vmem:[#allocation2 + $0xd8] sm:$0xff]
    %v661 = vld [vmem:[#allocation2 + $0xe0] sm:$0xff]
    %v662 = vld [vmem:[#allocation2 + $0xe8] sm:$0xff]
    %v663 = vld [vmem:[#allocation2 + $0xf0] sm:$0xff]
    %v664 = vld [vmem:[#allocation2 + $0xf8] sm:$0xff]
    %v665 = vld [vmem:[#allocation2 + $0x100] sm:$0xff]
    %v666 = vld [vmem:[#allocation2 + $0x108] sm:$0xff]
    %v667 = vld [vmem:[#allocation2 + $0x110] sm:$0xff]
    %v668 = vld [vmem:[#allocation2 + $0x118] sm:$0xff]
    %v669 = vld [vmem:[#allocation2 + $0x120] sm:$0xff]
    %v670 = vld [vmem:[#allocation2 + $0x128] sm:$0xff]
    %v671 = vld [vmem:[#allocation2 + $0x130] sm:$0xff]
    %v672 = vld [vmem:[#allocation2 + $0x138] sm:$0xff]
    %v673 = vld [vmem:[#allocation2 + $0x140] sm:$0xff]
    %v674 = vld [vmem:[#allocation2 + $0x148] sm:$0xff]
    %v675 = vld [vmem:[#allocation2 + $0x150] sm:$0x1]
    %v676 = vld [vmem:[#allocation2 + $0x158] sm:$0x1]
    %v677 = vld [vmem:[#allocation2 + $0x160] sm:$0x1]
    %v678 = vld [vmem:[#allocation2 + $0x168] sm:$0x1]
    %v679 = vld [vmem:[#allocation2 + $0x170] sm:$0x1]
    %v680 = vld [vmem:[#allocation2 + $0x178] sm:$0x1]
    %v681 = vld [vmem:[#allocation2 + $0x180] sm:$0x1]
    %v682 = vld [vmem:[#allocation2 + $0x188] sm:$0x1]
    %v683 = vld [vmem:[#allocation2 + $0x190] sm:$0x1]
    %v684 = vld [vmem:[#allocation2 + $0x198] sm:$0x1]
    %v685 = vld [vmem:[#allocation2 + $0x1a0] sm:$0x1]
    %v686 = vld [vmem:[#allocation2 + $0x1a8] sm:$0x1]
    %v687 = vld [vmem:[#allocation2 + $0x1b0] sm:$0x1]
    %v688 = vld [vmem:[#allocation2 + $0x1b8] sm:$0x1]
    %v689 = vmul.f32 %v577, %v577
    %v690 = vmul.f32 %v578, %v578
    %v691 = vmul.f32 %v579, %v579
    %v692 = vmul.f32 %v580, %v580
    %v693 = vmul.f32 %v581, %v581
    %v694 = vmul.f32 %v582, %v582
    %v695 = vmul.f32 %v583, %v583
    %v696 = vmul.f32 %v584, %v584
    %v697 = vmul.f32 %v585, %v585
    %v698 = vmul.f32 %v586, %v586
    %v699 = vmul.f32 %v587, %v587
    %v700 = vmul.f32 %v588, %v588
    %v701 = vmul.f32 %v589, %v589
    %v702 = vmul.f32 %v590, %v590
    %v703 = vmul.f32 %v591, %v591
    %v704 = vmul.f32 %v592, %v592
    %v705 = vmul.f32 %v593, %v593
    %v706 = vmul.f32 %v594, %v594
    %v707 = vmul.f32 %v595, %v595
    %v708 = vmul.f32 %v596, %v596
    %v709 = vmul.f32 %v597, %v597
    %v710 = vmul.f32 %v598, %v598
    %v711 = vmul.f32 %v599, %v599
    %v712 = vmul.f32 %v600, %v600
    %v713 = vmul.f32 %v601, %v601
    %v714 = vmul.f32 %v602, %v602
    %v715 = vmul.f32 %v603, %v603
    %v716 = vmul.f32 %v604, %v604
    %v717 = vmul.f32 %v605, %v605
    %v718 = vmul.f32 %v606, %v606
    %v719 = vmul.f32 %v607, %v607
    %v720 = vmul.f32 %v608, %v608
    %v721 = vmul.f32 %v609, %v609
    %v722 = vmul.f32 %v610, %v610
    %v723 = vmul.f32 %v611, %v611
    %v724 = vmul.f32 %v612, %v612
    %v725 = vmul.f32 %v613, %v613
    %v726 = vmul.f32 %v614, %v614
    %v727 = vmul.f32 %v615, %v615
    %v728 = vmul.f32 %v616, %v616
    %v729 = vmul.f32 %v617, %v617
    %v730 = vmul.f32 %v618, %v618
    %v731 = vmul.f32 %v619, %v619
    %v732 = vmul.f32 %v620, %v620
    %v733 = vmul.f32 %v621, %v621
    %v734 = vmul.f32 %v622, %v622
    %v735 = vmul.f32 %v623, %v623
    %v736 = vmul.f32 %v624, %v624
    %v737 = vmul.f32 %v625, %v625
    %v738 = vmul.f32 %v626, %v626
    %v739 = vmul.f32 %v627, %v627
    %v740 = vmul.f32 %v628, %v628
    %v741 = vmul.f32 %v629, %v629
    %v742 = vmul.f32 %v630, %v630
    %v743 = vmul.f32 %v631, %v631
    %v744 = vmul.f32 %v632, %v632
    %v745 = vmul.f32 %v521, %v689
    %v746 = vmul.f32 %v522, %v690
    %v747 = vmul.f32 %v523, %v691
    %v748 = vmul.f32 %v524, %v692
    %v749 = vmul.f32 %v525, %v693
    %v750 = vmul.f32 %v526, %v694
    %v751 = vmul.f32 %v527, %v695
    %v752 = vmul.f32 %v528, %v696
    %v753 = vmul.f32 %v529, %v697
    %v754 = vmul.f32 %v530, %v698
    %v755 = vmul.f32 %v531, %v699
    %v756 = vmul.f32 %v532, %v700
    %v757 = vmul.f32 %v533, %v701
    %v758 = vmul.f32 %v534, %v702
    %v759 = vmul.f32 %v535, %v703
    %v760 = vmul.f32 %v536, %v704
    %v761 = vmul.f32 %v537, %v705
    %v762 = vmul.f32 %v538, %v706
    %v763 = vmul.f32 %v539, %v707
    %v764 = vmul.f32 %v540, %v708
    %v765 = vmul.f32 %v541, %v709
    %v766 = vmul.f32 %v542, %v710
    %v767 = vmul.f32 %v543, %v711
    %v768 = vmul.f32 %v544, %v712
    %v769 = vmul.f32 %v545, %v713
    %v770 = vmul.f32 %v546, %v714
    %v771 = vmul.f32 %v547, %v715
    %v772 = vmul.f32 %v548, %v716
    %v773 = vmul.f32 %v549, %v717
    %v774 = vmul.f32 %v550, %v718
    %v775 = vmul.f32 %v551, %v719
    %v776 = vmul.f32 %v552, %v720
    %v777 = vmul.f32 %v553, %v721
    %v778 = vmul.f32 %v554, %v722
    %v779 = vmul.f32 %v555, %v723
    %v780 = vmul.f32 %v556, %v724
    %v781 = vmul.f32 %v557, %v725
    %v782 = vmul.f32 %v558, %v726
    %v783 = vmul.f32 %v559, %v727
    %v784 = vmul.f32 %v560, %v728
    %v785 = vmul.f32 %v561, %v729
    %v786 = vmul.f32 %v562, %v730
    %v787 = vmul.f32 %v563, %v731
    %v788 = vmul.f32 %v564, %v732
    %v789 = vmul.f32 %v565, %v733
    %v790 = vmul.f32 %v566, %v734
    %v791 = vmul.f32 %v567, %v735
    %v792 = vmul.f32 %v568, %v736
    %v793 = vmul.f32 %v569, %v737
    %v794 = vmul.f32 %v570, %v738
    %v795 = vmul.f32 %v571, %v739
    %v796 = vmul.f32 %v572, %v740
    %v797 = vmul.f32 %v573, %v741
    %v798 = vmul.f32 %v574, %v742
    %v799 = vmul.f32 %v575, %v743
    %v800 = vmul.f32 %v576, %v744
    %v801 = vadd.f32 %v633, %v745
    %v802 = vadd.f32 %v634, %v746
    %v803 = vadd.f32 %v635, %v747
    %v804 = vadd.f32 %v636, %v748
    %v805 = vadd.f32 %v637, %v749
    %v806 = vadd.f32 %v638, %v750
    %v807 = vadd.f32 %v639, %v751
    %v808 = vadd.f32 %v640, %v752
    %v809 = vadd.f32 %v641, %v753
    %v810 = vadd.f32 %v642, %v754
    %v811 = vadd.f32 %v643, %v755
    %v812 = vadd.f32 %v644, %v756
    %v813 = vadd.f32 %v645, %v757
    %v814 = vadd.f32 %v646, %v758
    %v815 = vadd.f32 %v647, %v759
    %v816 = vadd.f32 %v648, %v760
    %v817 = vadd.f32 %v649, %v761
    %v818 = vadd.f32 %v650, %v762
    %v819 = vadd.f32 %v651, %v763
    %v820 = vadd.f32 %v652, %v764
    %v821 = vadd.f32 %v653, %v765
    %v822 = vadd.f32 %v654, %v766
    %v823 = vadd.f32 %v655, %v767
    %v824 = vadd.f32 %v656, %v768
    %v825 = vadd.f32 %v657, %v769
    %v826 = vadd.f32 %v658, %v770
    %v827 = vadd.f32 %v659, %v771
    %v828 = vadd.f32 %v660, %v772
    %v829 = vadd.f32 %v661, %v773
    %v830 = vadd.f32 %v662, %v774
    %v831 = vadd.f32 %v663, %v775
    %v832 = vadd.f32 %v664, %v776
    %v833 = vadd.f32 %v665, %v777
    %v834 = vadd.f32 %v666, %v778
    %v835 = vadd.f32 %v667, %v779
    %v836 = vadd.f32 %v668, %v780
    %v837 = vadd.f32 %v669, %v781
    %v838 = vadd.f32 %v670, %v782
    %v839 = vadd.f32 %v671, %v783
    %v840 = vadd.f32 %v672, %v784
    %v841 = vadd.f32 %v673, %v785
    %v842 = vadd.f32 %v674, %v786
    %v843 = vadd.f32 %v675, %v787
    %v844 = vadd.f32 %v676, %v788
    %v845 = vadd.f32 %v677, %v789
    %v846 = vadd.f32 %v678, %v790
    %v847 = vadd.f32 %v679, %v791
    %v848 = vadd.f32 %v680, %v792
    %v849 = vadd.f32 %v681, %v793
    %v850 = vadd.f32 %v682, %v794
    %v851 = vadd.f32 %v683, %v795
    %v852 = vadd.f32 %v684, %v796
    %v853 = vadd.f32 %v685, %v797
    %v854 = vadd.f32 %v686, %v798
    %v855 = vadd.f32 %v687, %v799
    %v856 = vadd.f32 %v688, %v800
    %857 = vst [vmem:[#allocation2] sm:$0xff] %v801
    %858 = vst [vmem:[#allocation2 + $0x8] sm:$0xff] %v802
    %859 = vst [vmem:[#allocation2 + $0x10] sm:$0xff] %v803
    %860 = vst [vmem:[#allocation2 + $0x18] sm:$0xff] %v804
    %861 = vst [vmem:[#allocation2 + $0x20] sm:$0xff] %v805
    %862 = vst [vmem:[#allocation2 + $0x28] sm:$0xff] %v806
    %863 = vst [vmem:[#allocation2 + $0x30] sm:$0xff] %v807
    %864 = vst [vmem:[#allocation2 + $0x38] sm:$0xff] %v808
    %865 = vst [vmem:[#allocation2 + $0x40] sm:$0xff] %v809
    %866 = vst [vmem:[#allocation2 + $0x48] sm:$0xff] %v810
    %867 = vst [vmem:[#allocation2 + $0x50] sm:$0xff] %v811
    %868 = vst [vmem:[#allocation2 + $0x58] sm:$0xff] %v812
    %869 = vst [vmem:[#allocation2 + $0x60] sm:$0xff] %v813
    %870 = vst [vmem:[#allocation2 + $0x68] sm:$0xff] %v814
    %871 = vst [vmem:[#allocation2 + $0x70] sm:$0xff] %v815
    %872 = vst [vmem:[#allocation2 + $0x78] sm:$0xff] %v816
    %873 = vst [vmem:[#allocation2 + $0x80] sm:$0xff] %v817
    %874 = vst [vmem:[#allocation2 + $0x88] sm:$0xff] %v818
    %875 = vst [vmem:[#allocation2 + $0x90] sm:$0xff] %v819
    %876 = vst [vmem:[#allocation2 + $0x98] sm:$0xff] %v820
    %877 = vst [vmem:[#allocation2 + $0xa0] sm:$0xff] %v821
    %878 = vst [vmem:[#allocation2 + $0xa8] sm:$0xff] %v822
    %879 = vst [vmem:[#allocation2 + $0xb0] sm:$0xff] %v823
    %880 = vst [vmem:[#allocation2 + $0xb8] sm:$0xff] %v824
    %881 = vst [vmem:[#allocation2 + $0xc0] sm:$0xff] %v825
    %882 = vst [vmem:[#allocation2 + $0xc8] sm:$0xff] %v826
    %883 = vst [vmem:[#allocation2 + $0xd0] sm:$0xff] %v827
    %884 = vst [vmem:[#allocation2 + $0xd8] sm:$0xff] %v828
    %885 = vst [vmem:[#allocation2 + $0xe0] sm:$0xff] %v829
    %886 = vst [vmem:[#allocation2 + $0xe8] sm:$0xff] %v830
    %887 = vst [vmem:[#allocation2 + $0xf0] sm:$0xff] %v831
    %888 = vst [vmem:[#allocation2 + $0xf8] sm:$0xff] %v832
    %889 = vst [vmem:[#allocation2 + $0x100] sm:$0xff] %v833
    %890 = vst [vmem:[#allocation2 + $0x108] sm:$0xff] %v834
    %891 = vst [vmem:[#allocation2 + $0x110] sm:$0xff] %v835
    %892 = vst [vmem:[#allocation2 + $0x118] sm:$0xff] %v836
    %893 = vst [vmem:[#allocation2 + $0x120] sm:$0xff] %v837
    %894 = vst [vmem:[#allocation2 + $0x128] sm:$0xff] %v838
    %895 = vst [vmem:[#allocation2 + $0x130] sm:$0xff] %v839
    %896 = vst [vmem:[#allocation2 + $0x138] sm:$0xff] %v840
    %897 = vst [vmem:[#allocation2 + $0x140] sm:$0xff] %v841
    %898 = vst [vmem:[#allocation2 + $0x148] sm:$0xff] %v842
    %899 = vst [vmem:[#allocation2 + $0x150] sm:$0x1] %v843
    %900 = vst [vmem:[#allocation2 + $0x158] sm:$0x1] %v844
    %901 = vst [vmem:[#allocation2 + $0x160] sm:$0x1] %v845
    %902 = vst [vmem:[#allocation2 + $0x168] sm:$0x1] %v846
    %903 = vst [vmem:[#allocation2 + $0x170] sm:$0x1] %v847
    %904 = vst [vmem:[#allocation2 + $0x178] sm:$0x1] %v848
    %905 = vst [vmem:[#allocation2 + $0x180] sm:$0x1] %v849
    %906 = vst [vmem:[#allocation2 + $0x188] sm:$0x1] %v850
    %907 = vst [vmem:[#allocation2 + $0x190] sm:$0x1] %v851
    %908 = vst [vmem:[#allocation2 + $0x198] sm:$0x1] %v852
    %909 = vst [vmem:[#allocation2 + $0x1a0] sm:$0x1] %v853
    %910 = vst [vmem:[#allocation2 + $0x1a8] sm:$0x1] %v854
    %911 = vst [vmem:[#allocation2 + $0x1b0] sm:$0x1] %v855
    %912 = vst [vmem:[#allocation2 + $0x1b8] sm:$0x1] %v856
    // Predicated region
    $region26: #{tpu_custom_call.1} parent=1 // pred_check
      %p913 = pneg %p43
    $region27: #{tpu_custom_call.1} parent=1 // pred_check_branch
      %915 = sbr.rel (%p913) target = $region29
    $region28: #{tpu_custom_call.1} parent=1 // pred_region
      %v916 = vld [vmem:[#allocation2] sm:$0xff]
      %v917 = vld [vmem:[#allocation2 + $0x8] sm:$0xff]
      %v918 = vld [vmem:[#allocation2 + $0x10] sm:$0xff]
      %v919 = vld [vmem:[#allocation2 + $0x18] sm:$0xff]
      %v920 = vld [vmem:[#allocation2 + $0x20] sm:$0xff]
      %v921 = vld [vmem:[#allocation2 + $0x28] sm:$0xff]
      %v922 = vld [vmem:[#allocation2 + $0x30] sm:$0xff]
      %v923 = vld [vmem:[#allocation2 + $0x38] sm:$0xff]
      %v924 = vld [vmem:[#allocation2 + $0x40] sm:$0xff]
      %v925 = vld [vmem:[#allocation2 + $0x48] sm:$0xff]
      %v926 = vld [vmem:[#allocation2 + $0x50] sm:$0xff]
      %v927 = vld [vmem:[#allocation2 + $0x58] sm:$0xff]
      %v928 = vld [vmem:[#allocation2 + $0x60] sm:$0xff]
      %v929 = vld [vmem:[#allocation2 + $0x68] sm:$0xff]
      %v930 = vld [vmem:[#allocation2 + $0x70] sm:$0xff]
      %v931 = vld [vmem:[#allocation2 + $0x78] sm:$0xff]
      %v932 = vld [vmem:[#allocation2 + $0x80] sm:$0xff]
      %v933 = vld [vmem:[#allocation2 + $0x88] sm:$0xff]
      %v934 = vld [vmem:[#allocation2 + $0x90] sm:$0xff]
      %v935 = vld [vmem:[#allocation2 + $0x98] sm:$0xff]
      %v936 = vld [vmem:[#allocation2 + $0xa0] sm:$0xff]
      %v937 = vld [vmem:[#allocation2 + $0xa8] sm:$0xff]
      %v938 = vld [vmem:[#allocation2 + $0xb0] sm:$0xff]
      %v939 = vld [vmem:[#allocation2 + $0xb8] sm:$0xff]
      %v940 = vld [vmem:[#allocation2 + $0xc0] sm:$0xff]
      %v941 = vld [vmem:[#allocation2 + $0xc8] sm:$0xff]
      %v942 = vld [vmem:[#allocation2 + $0xd0] sm:$0xff]
      %v943 = vld [vmem:[#allocation2 + $0xd8] sm:$0xff]
      %v944 = vld [vmem:[#allocation2 + $0xe0] sm:$0xff]
      %v945 = vld [vmem:[#allocation2 + $0xe8] sm:$0xff]
      %v946 = vld [vmem:[#allocation2 + $0xf0] sm:$0xff]
      %v947 = vld [vmem:[#allocation2 + $0xf8] sm:$0xff]
      %v948 = vld [vmem:[#allocation2 + $0x100] sm:$0xff]
      %v949 = vld [vmem:[#allocation2 + $0x108] sm:$0xff]
      %v950 = vld [vmem:[#allocation2 + $0x110] sm:$0xff]
      %v951 = vld [vmem:[#allocation2 + $0x118] sm:$0xff]
      %v952 = vld [vmem:[#allocation2 + $0x120] sm:$0xff]
      %v953 = vld [vmem:[#allocation2 + $0x128] sm:$0xff]
      %v954 = vld [vmem:[#allocation2 + $0x130] sm:$0xff]
      %v955 = vld [vmem:[#allocation2 + $0x138] sm:$0xff]
      %v956 = vld [vmem:[#allocation2 + $0x140] sm:$0xff]
      %v957 = vld [vmem:[#allocation2 + $0x148] sm:$0xff]
      %v958 = vld [vmem:[#allocation2 + $0x150] sm:$0x1]
      %v959 = vld [vmem:[#allocation2 + $0x158] sm:$0x1]
      %v960 = vld [vmem:[#allocation2 + $0x160] sm:$0x1]
      %v961 = vld [vmem:[#allocation2 + $0x168] sm:$0x1]
      %v962 = vld [vmem:[#allocation2 + $0x170] sm:$0x1]
      %v963 = vld [vmem:[#allocation2 + $0x178] sm:$0x1]
      %v964 = vld [vmem:[#allocation2 + $0x180] sm:$0x1]
      %v965 = vld [vmem:[#allocation2 + $0x188] sm:$0x1]
      %v966 = vld [vmem:[#allocation2 + $0x190] sm:$0x1]
      %v967 = vld [vmem:[#allocation2 + $0x198] sm:$0x1]
      %v968 = vld [vmem:[#allocation2 + $0x1a0] sm:$0x1]
      %v969 = vld [vmem:[#allocation2 + $0x1a8] sm:$0x1]
      %v970 = vld [vmem:[#allocation2 + $0x1b0] sm:$0x1]
      %v971 = vld [vmem:[#allocation2 + $0x1b8] sm:$0x1]
      %v972 = vadd.f32 %v916, %v917
      %v973 = vadd.f32 %v972, %v918
      %v974 = vadd.f32 %v973, %v919
      %v975 = vadd.f32 %v974, %v920
      %v976 = vadd.f32 %v975, %v921
      %v977 = vadd.f32 %v976, %v922
      %v978 = vadd.f32 %v977, %v923
      %v979 = vadd.f32 %v978, %v924
      %v980 = vadd.f32 %v979, %v925
      %v981 = vadd.f32 %v980, %v926
      %v982 = vadd.f32 %v981, %v927
      %v983 = vadd.f32 %v982, %v928
      %v984 = vadd.f32 %v983, %v929
      %v985 = vadd.f32 %v984, %v930
      %v986 = vadd.f32 %v985, %v931
      %v987 = vadd.f32 %v986, %v932
      %v988 = vadd.f32 %v987, %v933
      %v989 = vadd.f32 %v988, %v934
      %v990 = vadd.f32 %v989, %v935
      %v991 = vadd.f32 %v990, %v936
      %v992 = vadd.f32 %v991, %v937
      %v993 = vadd.f32 %v992, %v938
      %v994 = vadd.f32 %v993, %v939
      %v995 = vadd.f32 %v994, %v940
      %v996 = vadd.f32 %v995, %v941
      %v997 = vadd.f32 %v996, %v942
      %v998 = vadd.f32 %v997, %v943
      %v999 = vadd.f32 %v998, %v944
      %v1000 = vadd.f32 %v999, %v945
      %v1001 = vadd.f32 %v1000, %v946
      %v1002 = vadd.f32 %v1001, %v947
      %v1003 = vadd.f32 %v1002, %v948
      %v1004 = vadd.f32 %v1003, %v949
      %v1005 = vadd.f32 %v1004, %v950
      %v1006 = vadd.f32 %v1005, %v951
      %v1007 = vadd.f32 %v1006, %v952
      %v1008 = vadd.f32 %v1007, %v953
      %v1009 = vadd.f32 %v1008, %v954
      %v1010 = vadd.f32 %v1009, %v955
      %v1011 = vadd.f32 %v1010, %v956
      %v1012 = vadd.f32 %v1011, %v957
      %vm1013 = vcmask 1040384
      %v1014 = vsel %vm1013, %v958, 0.0
      %v1015 = vadd.f32 %v1012, %v1014
      %v1016 = vsel %vm1013, %v959, 0.0
      %v1017 = vadd.f32 %v1015, %v1016
      %v1018 = vsel %vm1013, %v960, 0.0
      %v1019 = vadd.f32 %v1017, %v1018
      %v1020 = vsel %vm1013, %v961, 0.0
      %v1021 = vadd.f32 %v1019, %v1020
      %v1022 = vsel %vm1013, %v962, 0.0
      %v1023 = vadd.f32 %v1021, %v1022
      %v1024 = vsel %vm1013, %v963, 0.0
      %v1025 = vadd.f32 %v1023, %v1024
      %v1026 = vsel %vm1013, %v964, 0.0
      %v1027 = vadd.f32 %v1025, %v1026
      %v1028 = vsel %vm1013, %v965, 0.0
      %v1029 = vadd.f32 %v1027, %v1028
      %v1030 = vsel %vm1013, %v966, 0.0
      %v1031 = vadd.f32 %v1029, %v1030
      %v1032 = vsel %vm1013, %v967, 0.0
      %v1033 = vadd.f32 %v1031, %v1032
      %v1034 = vsel %vm1013, %v968, 0.0
      %v1035 = vadd.f32 %v1033, %v1034
      %v1036 = vsel %vm1013, %v969, 0.0
      %v1037 = vadd.f32 %v1035, %v1036
      %v1038 = vsel %vm1013, %v970, 0.0
      %v1039 = vadd.f32 %v1037, %v1038
      %v1040 = vsel %vm1013, %v971, 0.0
      %v1041 = vadd.f32 %v1039, %v1040
      %1042 = vadd.xlane.f32.xlu0 %v1041
      %v1043 = vpop.xlane.xlu0 %1042
      %v1044 = vrot.slane %v1043, 4
      %v1045 = vadd.f32 %v1043, %v1044
      %v1046 = vrot.slane %v1045, 2
      %v1047 = vadd.f32 %v1045, %v1046
      %v1048 = vrot.slane %v1047, 1
      %v1049 = vadd.f32 %v1047, %v1048
      %s1050 = vtos %v1049
      %s1051 = smul.f32 %s1050, 0.5
      %s1052 = scalar_lea.smem [#allocation8], 0
      %1053 = sst [smem:[%s1052]] %s1051
    $region29: #{tpu_custom_call.1} parent=1 // pred_fallthru
      _
    // Predicated region
    $region30: #{tpu_custom_call.1} parent=1 // pred_check
      _
    $region31: #{tpu_custom_call.1} parent=1 // pred_check_branch
      %1055 = sbr.rel (0) target = $region33
    $region32: #{tpu_custom_call.1} parent=1 // pred_region
      %s1057 = ssub.s32 16, 16
      %1058 = vsyncadd [#allocation5], %s1057
      %1061 = dma.smem_to_hbm [#allocation8], 16, %s3, [#allocation5]
    $region33: #{tpu_custom_call.1} parent=1 // pred_fallthru
      _
    // Predicated region
    $region34: #{tpu_custom_call.1} parent=1 // pred_check
      _
    $region35: #{tpu_custom_call.1} parent=1 // pred_check_branch
      %1063 = sbr.rel (0) target = $region37
    $region36: #{tpu_custom_call.1} parent=1 // pred_region
      %1064 = dma.done [#allocation5], 16
    $region37: #{tpu_custom_call.1} parent=1 // pred_fallthru
      _
    %1065 = sfence
    %1066 = vsyncpa [#allocation4], 1
    %1067 = vsyncpa [#allocation7], 1
    %1068 = vsyncpa [#allocation5], 1

</llo_original>
